<compile_context>
chip_gen: v7x
topology: tpu7x:2x2x1
jax: 0.10.0
libtpu: 0.0.40
codegen_flags: <defaults>
</compile_context>

<pallas_src>
import jax
import jax.numpy as jnp
from jax import lax
from jax.experimental import pallas as pl
from jax.experimental.pallas import tpu as pltpu  # noqa: F401  (kept for TPU-specific params if shapes scale)

LANE = 128  # TPU lane width; logits slab is padded to a multiple of this.


# -----------------------------------------------------------------------------
# Fused kernel
# -----------------------------------------------------------------------------
def fused_cnn_kernel(xcol_ref, wcol_ref, bconv_ref, mask_ref, whead_ref, bhead_ref, out_ref):
    """Entire CNNClassifier forward in one kernel.

    xcol_ref : (B, Lo, K*C)   bf16  im2col'd input (unified K_max window)
    wcol_ref : (K*C, F)       bf16  unified filter bank (zero-padded taps)
    bconv_ref: (1, 1, F)      f32   conv biases
    mask_ref : (1, Lo, F)     f32   1.0 where window t is a valid output for filter f
    whead_ref: (F, OUT_PAD)   bf16  all linear heads packed + zero padded to OUT_PAD lanes
    bhead_ref: (1, OUT_PAD)   f32
    out_ref  : (B, OUT_PAD)   f32   lane-dense logits slab
    """
    # One MXU matmul covers both conv branches (contract over K*C).
    acc = lax.dot_general(
        xcol_ref[...], wcol_ref[...],
        dimension_numbers=(((2,), (0,)), ((), ())),
        preferred_element_type=jnp.float32,
    )                                                    # (B, Lo, F) f32
    acc = jnp.maximum(acc + bconv_ref[...], 0.0)         # bias + ReLU
    # Global max-pool over valid windows only.  Masking (multiply by 0/1) after
    # ReLU is exact: invalid positions become 0 and ReLU outputs are >= 0.
    pooled = jnp.max(acc * mask_ref[...], axis=1)        # (B, F)
    # Both linear heads as one lane-dense matmul + bias.
    logits = jnp.dot(pooled.astype(jnp.bfloat16), whead_ref[...],
                     preferred_element_type=jnp.float32) + bhead_ref[...]
    out_ref[...] = logits


def _full_spec(shape):
    # gridless call: whole array as a single block
    return pl.BlockSpec(shape, lambda: (0,) * len(shape))


# -----------------------------------------------------------------------------
# One-time parameter packing (hoisted out of the per-call path)
# -----------------------------------------------------------------------------
def pack_params(conv_params, linear_params, in_channels, seq_len):
    ksizes = [w.shape[2] for (w, _) in conv_params]
    k_max, k_min = max(ksizes), min(ksizes)
    l_out = seq_len - k_min + 1                       # unified window count
    f_total = sum(w.shape[0] for (w, _) in conv_params)

    # Unified filter bank: zero-pad each branch's taps to k_max.
    w_banks, b_banks, valid_cols = [], [], []
    for (w, b) in conv_params:
        f_i, _, k_i = w.shape
        w_banks.append(jnp.pad(w, ((0, 0), (0, 0), (0, k_max - k_i))))
        b_banks.append(b)
        valid_cols.append(jnp.full((f_i,), seq_len - k_i + 1, jnp.int32))
    w_u = jnp.concatenate(w_banks, axis=0)            # (F, C, K_max)
    b_u = jnp.concatenate(b_banks, axis=0)            # (F,)
    n_valid = jnp.concatenate(valid_cols, axis=0)     # (F,)

    # w_col[k*C + c, f] = w_u[f, c, k]  (matches the im2col layout in forward()).
    w_col = jnp.transpose(w_u, (2, 1, 0)).reshape(k_max * in_channels, f_total)
    b_conv = b_u.reshape(1, 1, f_total).astype(jnp.float32)
    t_idx = jnp.arange(l_out, dtype=jnp.int32).reshape(1, l_out, 1)
    mask = (t_idx < n_valid.reshape(1, 1, f_total)).astype(jnp.float32)   # (1, Lo, F)

    # Pack all linear heads into one lane-dense weight slab.
    label_counts = [w.shape[0] for (w, _) in linear_params]
    total_labels = sum(label_counts)
    out_pad = max(LANE, ((total_labels + LANE - 1) // LANE) * LANE)
    w_head = jnp.zeros((f_total, out_pad), jnp.float32)
    b_head = jnp.zeros((1, out_pad), jnp.float32)
    off = 0
    for (w, b) in linear_params:
        nl = w.shape[0]
        w_head = w_head.at[:, off:off + nl].set(w.T)
        b_head = b_head.at[:, off:off + nl].set(b.reshape(1, nl))
        off += nl

    packed = dict(
        w_col=w_col.astype(jnp.bfloat16),
        b_conv=b_conv,
        mask=mask,
        w_head=w_head.astype(jnp.bfloat16),
        b_head=b_head,
    )
    meta = dict(k_max=k_max, l_out=l_out, f_total=f_total, out_pad=out_pad,
                label_counts=label_counts, in_channels=in_channels, seq_len=seq_len)
    return packed, meta


# -----------------------------------------------------------------------------
# Forward
# -----------------------------------------------------------------------------
def make_forward(packed, meta):
    k_max = meta["k_max"]
    l_out = meta["l_out"]
    c = meta["in_channels"]
    f_total = meta["f_total"]
    out_pad = meta["out_pad"]
    label_counts = meta["label_counts"]
    seq_len = meta["seq_len"]
    kc = k_max * c

    @jax.jit
    def forward(x):
        batch = x.shape[0]
        # im2col: (B, C, L) -> (B, Lo, K*C) with layout [k*C + c], built from a
        # right-zero-padded sequence so all filter sizes share one window count.
        xt = jnp.transpose(x, (0, 2, 1))                                       # (B, L, C)
        xt = jnp.pad(xt, ((0, 0), (0, l_out + k_max - 1 - seq_len), (0, 0)))   # (B, Lpad, C)
        x_col = jnp.concatenate(
            [xt[:, k:k + l_out, :] for k in range(k_max)], axis=-1
        ).astype(jnp.bfloat16)                                                 # (B, Lo, K*C)

        cost = pl.CostEstimate(
            flops=2 * batch * l_out * kc * f_total + 2 * batch * f_total * out_pad,
            transcendentals=0,
            bytes_accessed=(x_col.size * 2 + packed["w_col"].size * 2
                            + packed["b_conv"].size * 4 + packed["mask"].size * 4
                            + packed["w_head"].size * 2 + packed["b_head"].size * 4
                            + batch * out_pad * 4),
        )

        slab = pl.pallas_call(
            fused_cnn_kernel,
            out_shape=jax.ShapeDtypeStruct((batch, out_pad), jnp.float32),
            in_specs=[_full_spec(x_col.shape),
                      _full_spec(packed["w_col"].shape),
                      _full_spec(packed["b_conv"].shape),
                      _full_spec(packed["mask"].shape),
                      _full_spec(packed["w_head"].shape),
                      _full_spec(packed["b_head"].shape)],
            out_specs=_full_spec((batch, out_pad)),
            cost_estimate=cost,
        )(x_col, packed["w_col"], packed["b_conv"], packed["mask"],
          packed["w_head"], packed["b_head"])

        # TODO(synk): nn.Dropout is identity at inference time; not applied.
        outs, off = [], 0
        for nl in label_counts:
            outs.append(slab[:, off:off + nl])
            off += nl
        return outs

    return forward


# -----------------------------------------------------------------------------
# Pure-JAX reference (straight translation of the PyTorch forward, f32)
# -----------------------------------------------------------------------------
def reference_forward(x, conv_params, linear_params):
    pools = []
    length = x.shape[2]
    for (w, b) in conv_params:
        _, _, k = w.shape
        lo = length - k + 1
        acc = jnp.zeros((x.shape[0], lo, w.shape[0]), jnp.float32)
        for kk in range(k):
            acc = acc + jnp.einsum("bcl,fc->blf", x[:, :, kk:kk + lo], w[:, :, kk])
        acc = jnp.maximum(acc + b[None, None, :], 0.0)
        pools.append(jnp.max(acc, axis=1))
    joined = jnp.concatenate(pools, axis=1)
    return [joined @ w.T + b[None, :] for (w, b) in linear_params]


# -----------------------------------------------------------------------------
# Parameter construction (deterministic, synthetic)
# -----------------------------------------------------------------------------
def init_params(key, in_channels, n_filters, filter_sizes, num_label_arr):
    conv_params = []
    for nf, ks in zip(n_filters, filter_sizes):
        key, kw, kb = jax.random.split(key, 3)
        w = jax.random.normal(kw, (nf, in_channels, ks), jnp.float32) * 0.1
        b = jax.random.normal(kb, (nf,), jnp.float32) * 0.1
        conv_params.append((w, b))

    hidden = sum(n_filters)
    linear_params = []
    for nl in num_label_arr:
        key, kw, kb = jax.random.split(key, 3)
        w = jax.random.normal(kw, (nl, hidden), jnp.float32) * 0.1
        b = jax.random.normal(kb, (nl,), jnp.float32) * 0.1
        linear_params.append((w, b))
    return conv_params, linear_params


# -----------------------------------------------------------------------------
# Main
# -----------------------------------------------------------------------------
if __name__ == "__main__":
    # module hyper-params (small, consistent with the PyTorch module)
    embed_dim = 4            # unused by forward (kept for signature parity)
    in_channels = 4
    n_filters = [8, 8]
    filter_sizes = [3, 4]
    num_label_arr = [2, 2]   # multi-label, 2 classes each
    dropout_prob = 0.5       # identity at inference
    batch, seq_len = 2, 16

    key = jax.random.PRNGKey(0)
    key, kx = jax.random.split(key)
    x = jax.random.normal(kx, (batch, in_channels, seq_len), jnp.float32)

    conv_params, linear_params = init_params(
        key, in_channels, n_filters, filter_sizes, num_label_arr
    )

    packed, meta = pack_params(conv_params, linear_params, in_channels, seq_len)
    forward = make_forward(packed, meta)

    outs = forward(x)
    outs = [jax.block_until_ready(o) for o in outs]

    # sanity: shapes must match PyTorch semantics
    assert all(o.shape == (batch, nl) for o, nl in zip(outs, num_label_arr))

    # numerical sanity vs f32 reference (kernel uses bf16 operands, so loose tol)
    refs = reference_forward(x, conv_params, linear_params)
    for o, r in zip(outs, refs):
        assert jnp.allclose(o, r, rtol=5e-2, atol=5e-2), (o, r)

    print("KERNEL_OK")
</pallas_src>

<mosaic_0001>
module attributes {stable_mosaic.version = 11 : i64} {
  func.func @fused_cnn_kernel(%arg0: memref<2x14x16xbf16, #tpu.memory_space<vmem>>, %arg1: memref<16x16xbf16, #tpu.memory_space<vmem>>, %arg2: memref<1x1x16xf32, #tpu.memory_space<vmem>>, %arg3: memref<1x14x16xf32, #tpu.memory_space<vmem>>, %arg4: memref<16x128xbf16, #tpu.memory_space<vmem>>, %arg5: memref<1x128xf32, #tpu.memory_space<vmem>>, %arg6: memref<2x128xf32, #tpu.memory_space<vmem>>) attributes {dimension_semantics = [], scalar_prefetch = 0 : i64, scratch_operands = 0 : i64, tpu.core_type = #tpu.core_type<tc>} {
    %c0 = arith.constant 0 : index
    %c0_0 = arith.constant 0 : index
    %c0_1 = arith.constant 0 : index
    %0 = vector.load %arg0[%c0, %c0_0, %c0_1] : memref<2x14x16xbf16, #tpu.memory_space<vmem>>, vector<2x14x16xbf16>
    %c0_2 = arith.constant 0 : index
    %c0_3 = arith.constant 0 : index
    %1 = vector.load %arg1[%c0_2, %c0_3] : memref<16x16xbf16, #tpu.memory_space<vmem>>, vector<16x16xbf16>
    %cst = arith.constant dense<0.000000e+00> : vector<2x14x16xf32>
    %2 = tpu.matmul %0, %1, %cst {dimension_numbers = #tpu.dot_dimension_numbers<[2], [0], [0, 1], [1], [0, 0, 0, 1, 1, 1], [], []>} : vector<2x14x16xbf16>, vector<16x16xbf16>, vector<2x14x16xf32> -> vector<2x14x16xf32>
    %c0_4 = arith.constant 0 : index
    %c0_5 = arith.constant 0 : index
    %c0_6 = arith.constant 0 : index
    %3 = vector.load %arg2[%c0_4, %c0_5, %c0_6] : memref<1x1x16xf32, #tpu.memory_space<vmem>>, vector<1x1x16xf32>
    %4 = vector.broadcast %3 : vector<1x1x16xf32> to vector<2x14x16xf32>
    %5 = arith.addf %2, %4 : vector<2x14x16xf32>
    %cst_7 = arith.constant 0.000000e+00 : f32
    %6 = vector.broadcast %cst_7 : f32 to vector<2x14x16xf32>
    %7 = arith.maximumf %5, %6 : vector<2x14x16xf32>
    %c0_8 = arith.constant 0 : index
    %c0_9 = arith.constant 0 : index
    %c0_10 = arith.constant 0 : index
    %8 = vector.load %arg3[%c0_8, %c0_9, %c0_10] : memref<1x14x16xf32, #tpu.memory_space<vmem>>, vector<1x14x16xf32>
    %9 = vector.broadcast %8 : vector<1x14x16xf32> to vector<2x14x16xf32>
    %10 = arith.mulf %7, %9 : vector<2x14x16xf32>
    %cst_11 = arith.constant dense<0xFF800000> : vector<2x16xf32>
    %11 = vector.multi_reduction <maximumf>, %10, %cst_11 [1] : vector<2x14x16xf32> to vector<2x16xf32>
    %12 = arith.truncf %11 : vector<2x16xf32> to vector<2x16xbf16>
    %c0_12 = arith.constant 0 : index
    %c0_13 = arith.constant 0 : index
    %13 = vector.load %arg4[%c0_12, %c0_13] : memref<16x128xbf16, #tpu.memory_space<vmem>>, vector<16x128xbf16>
    %cst_14 = arith.constant dense<0.000000e+00> : vector<2x128xf32>
    %14 = tpu.matmul %12, %13, %cst_14 {dimension_numbers = #tpu.dot_dimension_numbers<[1], [0], [0], [1], [0, 0, 1, 1], [], []>} : vector<2x16xbf16>, vector<16x128xbf16>, vector<2x128xf32> -> vector<2x128xf32>
    %c0_15 = arith.constant 0 : index
    %c0_16 = arith.constant 0 : index
    %15 = vector.load %arg5[%c0_15, %c0_16] : memref<1x128xf32, #tpu.memory_space<vmem>>, vector<1x128xf32>
    %16 = vector.broadcast %15 : vector<1x128xf32> to vector<2x128xf32>
    %17 = arith.addf %14, %16 : vector<2x128xf32>
    %c0_17 = arith.constant 0 : index
    %c0_18 = arith.constant 0 : index
    %18 = vector.load %arg6[%c0_17, %c0_18] : memref<2x128xf32, #tpu.memory_space<vmem>>, vector<2x128xf32>
    tpu.vector_store %arg6[%c0_17, %c0_18], %17 {strides = array<i32>} : memref<2x128xf32, #tpu.memory_space<vmem>>, vector<2x128xf32>,
    return
  }
}

</mosaic_0001>

<llo_original>
// kernel: forward.1
$region0: #{forward.1}
  #allocation0 [shape = 'u32[]', space=smem, size = 0x4, offset = 0x4, fixed_abs, tag = 'smem constant byte address 0x4 - core index']
  #allocation1 [shape = 'u32[144,128]{1,0:T(1,128)}', space=vmem, size = 0x12000, scoped, tag = 'internal scratch']
  %s0 = inlined_call_operand.vmem [shape: bf16[2,14,16], index: 0, kind: input, shape index: {}]
  %s1 = inlined_call_operand.vmem [shape: bf16[16,16], index: 1, kind: input, shape index: {}]
  %s2 = inlined_call_operand.vmem [shape: f32[1,1,16], index: 2, kind: input, shape index: {}]
  %s3 = inlined_call_operand.vmem [shape: f32[1,14,16], index: 3, kind: input, shape index: {}]
  %s4 = inlined_call_operand.vmem [shape: bf16[16,128], index: 4, kind: input, shape index: {}]
  %s5 = inlined_call_operand.vmem [shape: f32[1,128], index: 5, kind: input, shape index: {}]
  %s6 = inlined_call_operand.vmem [shape: f32[2,128], index: 6, kind: output, shape index: {}]
  %s7 = sld [smem:[#allocation0]]
  $region34: #{forward.1} parent=0
    _
  %s9 = ssub.s32 1, %s7
  %s10 = scalar_select 0, %s9, %s7
  // Predicated region
  $region2: #{forward.1} parent=0 // pred_check
    _
  $region3: #{forward.1} parent=0 // pred_check_branch
    %12 = sbr.rel (0) target = $region5
  $region4: #{forward.1} parent=0 // pred_region
    _
  $region5: #{forward.1} parent=0 // pred_fallthru
    _
  // Predicated region
  $region6: #{forward.1} parent=0 // pred_check
    _
  $region7: #{forward.1} parent=0 // pred_check_branch
    %14 = sbr.rel (0) target = $region9
  $region8: #{forward.1} parent=0 // pred_region
    _
  $region9: #{forward.1} parent=0 // pred_fallthru
    _
  // Predicated region
  $region10: #{forward.1} parent=0 // pred_check
    _
  $region11: #{forward.1} parent=0 // pred_check_branch
    %16 = sbr.rel (0) target = $region13
  $region12: #{forward.1} parent=0 // pred_region
    _
  $region13: #{forward.1} parent=0 // pred_fallthru
    _
  // Predicated region
  $region14: #{forward.1} parent=0 // pred_check
    _
  $region15: #{forward.1} parent=0 // pred_check_branch
    %18 = sbr.rel (0) target = $region17
  $region16: #{forward.1} parent=0 // pred_region
    _
  $region17: #{forward.1} parent=0 // pred_fallthru
    _
  // Predicated region
  $region18: #{forward.1} parent=0 // pred_check
    _
  $region19: #{forward.1} parent=0 // pred_check_branch
    %20 = sbr.rel (0) target = $region21
  $region20: #{forward.1} parent=0 // pred_region
    _
  $region21: #{forward.1} parent=0 // pred_fallthru
    _
  // Predicated region
  $region22: #{forward.1} parent=0 // pred_check
    _
  $region23: #{forward.1} parent=0 // pred_check_branch
    %22 = sbr.rel (0) target = $region25
  $region24: #{forward.1} parent=0 // pred_region
    _
  $region25: #{forward.1} parent=0 // pred_fallthru
    _
  %v24 = vld [vmem:[%s0] sm:$0xf]
  %v25 = vld [vmem:[%s0 + $0x4] sm:$0x7]
  %v26 = vld [vmem:[%s0 + $0x8] sm:$0xf]
  %v27 = vld [vmem:[%s0 + $0xc] sm:$0x7]
  %v28 = vld [vmem:[%s1] sm:$0xf]
  %v29 = vld [vmem:[%s1 + $0x4] sm:$0xf]
  %v30 = vld [vmem:[%s2] sm:$0x1]
  %v32 = vlaneseq
  %v33 = vshrl.u32 %v32, 7
  %v34 = vsub.s32 0, %v33
  %v35 = vrot.slane %v30, %v34
  %v41 = vunpack.c.l.s4 1966171168
  %v42 = vunpack.c.0.s8 %v41
  %v43 = vlaneseq
  %v44 = vshrl.u32 %v43, 7
  %v45 = vsub.s32 %v42, %v44
  %v46 = vrot.slane %v24, %v45
  %v47 = vcombine.high %v46, %v46
  %v49 = vunpack.c.l.s4 1966171168
  %v50 = vunpack.c.0.s8 %v49
  %v51 = vlaneseq
  %v52 = vshrl.u32 %v51, 7
  %v53 = vsub.s32 %v50, %v52
  %v54 = vrot.slane %v46, %v53
  %v56 = vunpack.c.l.s4 1966171168
  %v57 = vunpack.c.0.s8 %v56
  %v58 = vlaneseq
  %v59 = vshrl.u32 %v58, 7
  %v60 = vsub.s32 %v57, %v59
  %v61 = vrot.slane %v47, %v60
  %v62 = vcombine.high %v54, %v54
  %v63 = vcombine.high %v61, %v61
  %v65 = vunpack.c.l.s4 1966171168
  %v66 = vunpack.c.0.s8 %v65
  %v67 = vlaneseq
  %v68 = vshrl.u32 %v67, 7
  %v69 = vsub.s32 %v66, %v68
  %v70 = vrot.slane %v25, %v69
  %v71 = vcombine.high %v70, %v70
  %v73 = vunpack.c.l.s4 1966171168
  %v74 = vunpack.c.0.s8 %v73
  %v75 = vlaneseq
  %v76 = vshrl.u32 %v75, 7
  %v77 = vsub.s32 %v74, %v76
  %v78 = vrot.slane %v70, %v77
  %v80 = vunpack.c.l.s4 1966171168
  %v81 = vunpack.c.0.s8 %v80
  %v82 = vlaneseq
  %v83 = vshrl.u32 %v82, 7
  %v84 = vsub.s32 %v81, %v83
  %v85 = vrot.slane %v71, %v84
  %v86 = vcombine.high %v78, %v78
  %v88 = vunpack.c.l.s4 1966171168
  %v89 = vunpack.c.0.s8 %v88
  %v90 = vlaneseq
  %v91 = vshrl.u32 %v90, 7
  %v92 = vsub.s32 %v89, %v91
  %v93 = vrot.slane %v26, %v92
  %v94 = vcombine.high %v93, %v93
  %v96 = vunpack.c.l.s4 1966171168
  %v97 = vunpack.c.0.s8 %v96
  %v98 = vlaneseq
  %v99 = vshrl.u32 %v98, 7
  %v100 = vsub.s32 %v97, %v99
  %v101 = vrot.slane %v93, %v100
  %v103 = vunpack.c.l.s4 1966171168
  %v104 = vunpack.c.0.s8 %v103
  %v105 = vlaneseq
  %v106 = vshrl.u32 %v105, 7
  %v107 = vsub.s32 %v104, %v106
  %v108 = vrot.slane %v94, %v107
  %v109 = vcombine.high %v101, %v101
  %v110 = vcombine.high %v108, %v108
  %v112 = vunpack.c.l.s4 1966171168
  %v113 = vunpack.c.0.s8 %v112
  %v114 = vlaneseq
  %v115 = vshrl.u32 %v114, 7
  %v116 = vsub.s32 %v113, %v115
  %v117 = vrot.slane %v27, %v116
  %v118 = vcombine.high %v117, %v117
  %v120 = vunpack.c.l.s4 1966171168
  %v121 = vunpack.c.0.s8 %v120
  %v122 = vlaneseq
  %v123 = vshrl.u32 %v122, 7
  %v124 = vsub.s32 %v121, %v123
  %v125 = vrot.slane %v117, %v124
  %v127 = vunpack.c.l.s4 1966171168
  %v128 = vunpack.c.0.s8 %v127
  %v129 = vlaneseq
  %v130 = vshrl.u32 %v129, 7
  %v131 = vsub.s32 %v128, %v130
  %v132 = vrot.slane %v118, %v131
  %v133 = vcombine.high %v125, %v125
  %v134 = vcombine.high %v35, %v35
  %v136 = vunpack.c.l.s4 1983009808
  %v137 = vunpack.c.0.s8 %v136
  %v138 = vlaneseq
  %v139 = vshrl.u32 %v138, 7
  %v140 = vsub.s32 %v137, %v139
  %v141 = vrot.slane %v35, %v140
  %v143 = vunpack.c.l.s4 1983009808
  %v144 = vunpack.c.0.s8 %v143
  %v145 = vlaneseq
  %v146 = vshrl.u32 %v145, 7
  %v147 = vsub.s32 %v144, %v146
  %v148 = vrot.slane %v134, %v147
  %v149 = vcombine.high %v141, %v141
  %v150 = vcombine.high %v148, %v148
  %v151 = vcombine.low %v54, %v61
  %v152 = vcombine.low %v62, %v63
  %v153 = vcombine.low %v78, %v85
  %v154 = vcombine.low %v86, %v101
  %v156 = vunpack.c.l.s4 1966171168
  %v157 = vunpack.c.0.s8 %v156
  %v158 = vlaneseq
  %v159 = vshrl.u32 %v158, 7
  %v160 = vsub.s32 %v157, %v159
  %v161 = vrot.slane %v151, %v160
  %v163 = vunpack.c.l.s4 1966171168
  %v164 = vunpack.c.0.s8 %v163
  %v165 = vlaneseq
  %v166 = vshrl.u32 %v165, 7
  %v167 = vsub.s32 %v164, %v166
  %v168 = vrot.slane %v152, %v167
  %v170 = vunpack.c.l.s4 1966171168
  %v171 = vunpack.c.0.s8 %v170
  %v172 = vlaneseq
  %v173 = vshrl.u32 %v172, 7
  %v174 = vsub.s32 %v171, %v173
  %v175 = vrot.slane %v153, %v174
  %v177 = vunpack.c.l.s4 1966171168
  %v178 = vunpack.c.0.s8 %v177
  %v179 = vlaneseq
  %v180 = vshrl.u32 %v179, 7
  %v181 = vsub.s32 %v178, %v180
  %v182 = vrot.slane %v154, %v181
  %v183 = vcombine.low %v161, %v168
  %v184 = vcombine.low %v175, %v182
  %v186 = vunpack.c.l.s4 1966171168
  %v187 = vunpack.c.0.s8 %v186
  %v188 = vlaneseq
  %v189 = vshrl.u32 %v188, 7
  %v190 = vsub.s32 %v187, %v189
  %v191 = vrot.slane %v183, %v190
  %v193 = vunpack.c.l.s4 1966171168
  %v194 = vunpack.c.0.s8 %v193
  %v195 = vlaneseq
  %v196 = vshrl.u32 %v195, 7
  %v197 = vsub.s32 %v194, %v196
  %v198 = vrot.slane %v184, %v197
  %v199 = vcombine.low %v191, %v198
  %v200 = vcombine.low %v108, %v109
  %v201 = vcombine.low %v110, %v125
  %v202 = vcombine.low %v132, %v133
  %v204 = vunpack.c.l.s4 1966171168
  %v205 = vunpack.c.0.s8 %v204
  %v206 = vlaneseq
  %v207 = vshrl.u32 %v206, 7
  %v208 = vsub.s32 %v205, %v207
  %v209 = vrot.slane %v200, %v208
  %v211 = vunpack.c.l.s4 1966171168
  %v212 = vunpack.c.0.s8 %v211
  %v213 = vlaneseq
  %v214 = vshrl.u32 %v213, 7
  %v215 = vsub.s32 %v212, %v214
  %v216 = vrot.slane %v201, %v215
  %v218 = vunpack.c.l.s4 1966171168
  %v219 = vunpack.c.0.s8 %v218
  %v220 = vlaneseq
  %v221 = vshrl.u32 %v220, 7
  %v222 = vsub.s32 %v219, %v221
  %v223 = vrot.slane %v202, %v222
  %v224 = vcombine.low %v209, %v216
  %v226 = vunpack.c.l.s4 1966171168
  %v227 = vunpack.c.0.s8 %v226
  %v228 = vlaneseq
  %v229 = vshrl.u32 %v228, 7
  %v230 = vsub.s32 %v227, %v229
  %v231 = vrot.slane %v224, %v230
  %v233 = vunpack.c.l.s4 1966171168
  %v234 = vunpack.c.0.s8 %v233
  %v235 = vlaneseq
  %v236 = vshrl.u32 %v235, 7
  %v237 = vsub.s32 %v234, %v236
  %v238 = vrot.slane %v223, %v237
  %v239 = vcombine.low %v231, %v238
  %v242 = vunpack.c.l.b16 %v28
  %v243 = vunpack.c.l.b16 %v29
  %v244 = vpack.c.b16 %v243, %v242
  %v246 = vcombine.low %v141, %v149
  %v247 = vcombine.low %v148, %v150
  %v249 = vunpack.c.l.s4 1983009808
  %v250 = vunpack.c.0.s8 %v249
  %v251 = vlaneseq
  %v252 = vshrl.u32 %v251, 7
  %v253 = vsub.s32 %v250, %v252
  %v254 = vrot.slane %v246, %v253
  %v256 = vunpack.c.l.s4 1983009808
  %v257 = vunpack.c.0.s8 %v256
  %v258 = vlaneseq
  %v259 = vshrl.u32 %v258, 7
  %v260 = vsub.s32 %v257, %v259
  %v261 = vrot.slane %v247, %v260
  %v262 = vcombine.low %v254, %v261
  %v263 = vcombine.low %v148, %v141
  %v265 = vunpack.c.l.s4 1983009808
  %v266 = vunpack.c.0.s8 %v265
  %v267 = vlaneseq
  %v268 = vshrl.u32 %v267, 7
  %v269 = vsub.s32 %v266, %v268
  %v270 = vrot.slane %v263, %v269
  %v271 = vcombine.low %v254, %v270
  %v272 = vcombine.low %v149, %v148
  %v273 = vcombine.low %v150, %v141
  %v275 = vunpack.c.l.s4 1983009808
  %v276 = vunpack.c.0.s8 %v275
  %v277 = vlaneseq
  %v278 = vshrl.u32 %v277, 7
  %v279 = vsub.s32 %v276, %v278
  %v280 = vrot.slane %v272, %v279
  %v282 = vunpack.c.l.s4 1983009808
  %v283 = vunpack.c.0.s8 %v282
  %v284 = vlaneseq
  %v285 = vshrl.u32 %v284, 7
  %v286 = vsub.s32 %v283, %v285
  %v287 = vrot.slane %v273, %v286
  %v288 = vcombine.low %v280, %v287
  %vm293 = vcmask 130048
  %v295 = vsel %vm293, %v199, 0
  %v298 = vsel %vm293, %v239, 0
  %300 = vmatprep.subr.bf16.mxu0 0
  %301 = vmatpush1.bf16.msra.mxu0 %v244
  %302 = vmatprep.subr.bf16.mxu0 0
  %303 = vmatpush1.bf16.msra.mxu0 0
  %304 = vmatprep.subr.bf16.mxu0 0
  %305 = vmatpush1.bf16.msra.mxu0 0
  %306 = vmatprep.subr.bf16.mxu0 0
  %307 = vmatpush1.bf16.msra.mxu0 0
  %308 = vmatprep.subr.bf16.mxu0 0
  %309 = vmatpush1.bf16.msra.mxu0 0
  %310 = vmatprep.subr.bf16.mxu0 0
  %311 = vmatpush1.bf16.msra.mxu0 0
  %312 = vmatprep.subr.bf16.mxu0 0
  %313 = vmatpush1.bf16.msra.mxu0 0
  %314 = vmatprep.subr.bf16.mxu0 0
  %315 = vmatpush1.bf16.msra.mxu0 0
  %316 = vmatprep.subr.bf16.mxu0 0
  %317 = vmatpush1.bf16.msra.mxu0 0
  %318 = vmatprep.subr.bf16.mxu0 0
  %319 = vmatpush1.bf16.msra.mxu0 0
  %320 = vmatprep.subr.bf16.mxu0 0
  %321 = vmatpush1.bf16.msra.mxu0 0
  %322 = vmatprep.subr.bf16.mxu0 0
  %323 = vmatpush1.bf16.msra.mxu0 0
  %324 = vmatprep.subr.bf16.mxu0 0
  %325 = vmatpush1.bf16.msra.mxu0 0
  %326 = vmatprep.subr.bf16.mxu0 0
  %327 = vmatpush1.bf16.msra.mxu0 0
  %328 = vmatprep.subr.bf16.mxu0 0
  %329 = vmatpush1.bf16.msra.mxu0 0
  %330 = vmatprep.subr.bf16.mxu0 0
  %331 = vmatpush1.bf16.msra.mxu0 0
  %332 = vmatprep.mubr.bf16.mxu0 0
  %333 = vmatmul.mubr.bf16.gmra.mrb[0].mxu0 %v295
  %v334 = vpop.f32.mrb[0].mxu0
  %v335 = vadd.f32 %v262, %v334
  %v336 = vpop.f32.mrb[0].mxu0
  %v337 = vpop.f32.mrb[0].mxu0
  %v338 = vadd.f32 %v271, %v337
  %v339 = vpop.f32.mrb[0].mxu0
  %340 = vmatprep.mubr.bf16.mxu0 0
  %341 = vmatmul.mubr.bf16.gmra.mrb[0].mxu0 %v298
  %v342 = vpop.f32.mrb[0].mxu0
  %v343 = vadd.f32 %v288, %v342
  %v344 = vpop.f32.mrb[0].mxu0
  %v345 = vpop.f32.mrb[0].mxu0
  %v346 = vadd.f32 %v280, %v345
  %v347 = vpop.f32.mrb[0].mxu0
  %348 = vdwg.mxu0
  %v353 = vcombine.high %v335, %v335
  %v355 = vunpack.c.l.s4 1983009808
  %v356 = vunpack.c.0.s8 %v355
  %v357 = vlaneseq
  %v358 = vshrl.u32 %v357, 7
  %v359 = vsub.s32 %v356, %v358
  %v360 = vrot.slane %v335, %v359
  %v362 = vunpack.c.l.s4 1983009808
  %v363 = vunpack.c.0.s8 %v362
  %v364 = vlaneseq
  %v365 = vshrl.u32 %v364, 7
  %v366 = vsub.s32 %v363, %v365
  %v367 = vrot.slane %v353, %v366
  %v368 = vcombine.high %v360, %v360
  %v369 = vcombine.high %v367, %v367
  %v370 = vcombine.high %v338, %v338
  %v372 = vunpack.c.l.s4 1983009808
  %v373 = vunpack.c.0.s8 %v372
  %v374 = vlaneseq
  %v375 = vshrl.u32 %v374, 7
  %v376 = vsub.s32 %v373, %v375
  %v377 = vrot.slane %v338, %v376
  %v379 = vunpack.c.l.s4 1983009808
  %v380 = vunpack.c.0.s8 %v379
  %v381 = vlaneseq
  %v382 = vshrl.u32 %v381, 7
  %v383 = vsub.s32 %v380, %v382
  %v384 = vrot.slane %v370, %v383
  %v385 = vcombine.high %v377, %v377
  %v386 = vcombine.high %v384, %v384
  %v387 = vcombine.high %v343, %v343
  %v389 = vunpack.c.l.s4 1983009808
  %v390 = vunpack.c.0.s8 %v389
  %v391 = vlaneseq
  %v392 = vshrl.u32 %v391, 7
  %v393 = vsub.s32 %v390, %v392
  %v394 = vrot.slane %v343, %v393
  %v396 = vunpack.c.l.s4 1983009808
  %v397 = vunpack.c.0.s8 %v396
  %v398 = vlaneseq
  %v399 = vshrl.u32 %v398, 7
  %v400 = vsub.s32 %v397, %v399
  %v401 = vrot.slane %v387, %v400
  %v402 = vcombine.high %v394, %v394
  %v403 = vcombine.high %v401, %v401
  %v405 = vunpack.c.l.s4 1983009808
  %v406 = vunpack.c.0.s8 %v405
  %v407 = vlaneseq
  %v408 = vshrl.u32 %v407, 7
  %v409 = vsub.s32 %v406, %v408
  %v410 = vrot.slane %v346, %v409
  %v411 = vcombine.high %v410, %v410
  %v426 = vmax.f32 %v360, 0.0
  %v427 = vmax.f32 %v368, 0.0
  %v428 = vmax.f32 %v367, 0.0
  %v429 = vmax.f32 %v369, 0.0
  %v430 = vmax.f32 %v377, 0.0
  %v431 = vmax.f32 %v385, 0.0
  %v432 = vmax.f32 %v384, 0.0
  %v433 = vmax.f32 %v386, 0.0
  %v434 = vmax.f32 %v394, 0.0
  %v435 = vmax.f32 %v402, 0.0
  %v436 = vmax.f32 %v401, 0.0
  %v437 = vmax.f32 %v403, 0.0
  %v438 = vmax.f32 %v410, 0.0
  %v439 = vmax.f32 %v411, 0.0
  %v440 = vld [vmem:[%s3] sm:$0xff]
  %v441 = vld [vmem:[%s3 + $0x8] sm:$0x3f]
  %v444 = vcombine.high %v440, %v440
  %v446 = vunpack.c.l.s4 1983009808
  %v447 = vunpack.c.0.s8 %v446
  %v448 = vlaneseq
  %v449 = vshrl.u32 %v448, 7
  %v450 = vsub.s32 %v447, %v449
  %v451 = vrot.slane %v440, %v450
  %v453 = vunpack.c.l.s4 1983009808
  %v454 = vunpack.c.0.s8 %v453
  %v455 = vlaneseq
  %v456 = vshrl.u32 %v455, 7
  %v457 = vsub.s32 %v454, %v456
  %v458 = vrot.slane %v444, %v457
  %v459 = vcombine.high %v451, %v451
  %v460 = vcombine.high %v458, %v458
  %v461 = vcombine.high %v441, %v441
  %v463 = vunpack.c.l.s4 1983009808
  %v464 = vunpack.c.0.s8 %v463
  %v465 = vlaneseq
  %v466 = vshrl.u32 %v465, 7
  %v467 = vsub.s32 %v464, %v466
  %v468 = vrot.slane %v441, %v467
  %v470 = vunpack.c.l.s4 1983009808
  %v471 = vunpack.c.0.s8 %v470
  %v472 = vlaneseq
  %v473 = vshrl.u32 %v472, 7
  %v474 = vsub.s32 %v471, %v473
  %v475 = vrot.slane %v461, %v474
  %v476 = vcombine.high %v468, %v468
  %v484 = vmul.f32 %v426, %v451
  %v485 = vmul.f32 %v427, %v459
  %v486 = vmul.f32 %v428, %v458
  %v487 = vmul.f32 %v429, %v460
  %v488 = vmul.f32 %v430, %v468
  %v489 = vmul.f32 %v431, %v476
  %v490 = vmul.f32 %v432, %v475
  %v491 = vmul.f32 %v433, %v451
  %v492 = vmul.f32 %v434, %v459
  %v493 = vmul.f32 %v435, %v458
  %v494 = vmul.f32 %v436, %v460
  %v495 = vmul.f32 %v437, %v468
  %v496 = vmul.f32 %v438, %v476
  %v497 = vmul.f32 %v439, %v475
  %v512 = vcombine.low %v484, %v485
  %v513 = vcombine.low %v486, %v487
  %v515 = vunpack.c.l.s4 1983009808
  %v516 = vunpack.c.0.s8 %v515
  %v517 = vlaneseq
  %v518 = vshrl.u32 %v517, 7
  %v519 = vsub.s32 %v516, %v518
  %v520 = vrot.slane %v512, %v519
  %v522 = vunpack.c.l.s4 1983009808
  %v523 = vunpack.c.0.s8 %v522
  %v524 = vlaneseq
  %v525 = vshrl.u32 %v524, 7
  %v526 = vsub.s32 %v523, %v525
  %v527 = vrot.slane %v513, %v526
  %v528 = vcombine.low %v520, %v527
  %v529 = vcombine.low %v488, %v489
  %v531 = vunpack.c.l.s4 1983009808
  %v532 = vunpack.c.0.s8 %v531
  %v533 = vlaneseq
  %v534 = vshrl.u32 %v533, 7
  %v535 = vsub.s32 %v532, %v534
  %v536 = vrot.slane %v529, %v535
  %v538 = vunpack.c.l.s4 1983009808
  %v539 = vunpack.c.0.s8 %v538
  %v540 = vlaneseq
  %v541 = vshrl.u32 %v540, 7
  %v542 = vsub.s32 %v539, %v541
  %v543 = vrot.slane %v490, %v542
  %v544 = vcombine.low %v536, %v543
  %v545 = vcombine.low %v491, %v492
  %v546 = vcombine.low %v493, %v494
  %v548 = vunpack.c.l.s4 1983009808
  %v549 = vunpack.c.0.s8 %v548
  %v550 = vlaneseq
  %v551 = vshrl.u32 %v550, 7
  %v552 = vsub.s32 %v549, %v551
  %v553 = vrot.slane %v545, %v552
  %v555 = vunpack.c.l.s4 1983009808
  %v556 = vunpack.c.0.s8 %v555
  %v557 = vlaneseq
  %v558 = vshrl.u32 %v557, 7
  %v559 = vsub.s32 %v556, %v558
  %v560 = vrot.slane %v546, %v559
  %v561 = vcombine.low %v553, %v560
  %v562 = vcombine.low %v495, %v496
  %v564 = vunpack.c.l.s4 1983009808
  %v565 = vunpack.c.0.s8 %v564
  %v566 = vlaneseq
  %v567 = vshrl.u32 %v566, 7
  %v568 = vsub.s32 %v565, %v567
  %v569 = vrot.slane %v562, %v568
  %v571 = vunpack.c.l.s4 1983009808
  %v572 = vunpack.c.0.s8 %v571
  %v573 = vlaneseq
  %v574 = vshrl.u32 %v573, 7
  %v575 = vsub.s32 %v572, %v574
  %v576 = vrot.slane %v497, %v575
  %v577 = vcombine.low %v569, %v576
  %v582 = vsel %vm293, %v528, -inf
  %vm583 = vcmask 128000
  %v584 = vsel %vm583, %v544, -inf
  %v585 = vmax.f32 %v582, %v584
  %v586 = vrot.slane %v585, 4
  %v587 = vmax.f32 %v585, %v586
  %v588 = vrot.slane %v587, 2
  %v589 = vmax.f32 %v587, %v588
  %v590 = vrot.slane %v589, 1
  %v591 = vmax.f32 %v589, %v590
  %v592 = vsel %vm293, %v561, -inf
  %v593 = vsel %vm583, %v577, -inf
  %v594 = vmax.f32 %v592, %v593
  %v595 = vrot.slane %v594, 4
  %v596 = vmax.f32 %v594, %v595
  %v597 = vrot.slane %v596, 2
  %v598 = vmax.f32 %v596, %v597
  %v599 = vrot.slane %v598, 1
  %v600 = vmax.f32 %v598, %v599
  %v601 = vpack.c.bf16 %v591, %v591
  %v602 = vpack.c.bf16 %v600, %v600
  %v603 = vld [vmem:[%s4] sm:$0xf]
  %v604 = vld [vmem:[%s4 + $0x4] sm:$0xf]
  %v605 = vld [vmem:[%s5] sm:$0x1]
  %v607 = vlaneseq
  %v608 = vshrl.u32 %v607, 7
  %v609 = vsub.s32 0, %v608
  %v610 = vrot.slane %v605, %v609
  %v614 = vunpack.c.l.b16 %v601
  %v615 = vunpack.c.l.b16 %v602
  %vm616 = vcmask 1041409
  %v617 = vsel %vm616, %v615, %v614
  %v618 = vpack.c.b16 %v617, %v617
  %v621 = vunpack.c.l.b16 %v603
  %v622 = vunpack.c.l.b16 %v604
  %v623 = vpack.c.b16 %v622, %v621
  %v626 = vsel %vm293, %v618, 0
  %628 = vmatprep.subr.bf16.mxu0 0
  %629 = vmatpush1.bf16.msra.mxu0 %v623
  %630 = vmatprep.subr.bf16.mxu0 0
  %631 = vmatpush1.bf16.msra.mxu0 0
  %632 = vmatprep.subr.bf16.mxu0 0
  %633 = vmatpush1.bf16.msra.mxu0 0
  %634 = vmatprep.subr.bf16.mxu0 0
  %635 = vmatpush1.bf16.msra.mxu0 0
  %636 = vmatprep.subr.bf16.mxu0 0
  %637 = vmatpush1.bf16.msra.mxu0 0
  %638 = vmatprep.subr.bf16.mxu0 0
  %639 = vmatpush1.bf16.msra.mxu0 0
  %640 = vmatprep.subr.bf16.mxu0 0
  %641 = vmatpush1.bf16.msra.mxu0 0
  %642 = vmatprep.subr.bf16.mxu0 0
  %643 = vmatpush1.bf16.msra.mxu0 0
  %644 = vmatprep.subr.bf16.mxu0 0
  %645 = vmatpush1.bf16.msra.mxu0 0
  %646 = vmatprep.subr.bf16.mxu0 0
  %647 = vmatpush1.bf16.msra.mxu0 0
  %648 = vmatprep.subr.bf16.mxu0 0
  %649 = vmatpush1.bf16.msra.mxu0 0
  %650 = vmatprep.subr.bf16.mxu0 0
  %651 = vmatpush1.bf16.msra.mxu0 0
  %652 = vmatprep.subr.bf16.mxu0 0
  %653 = vmatpush1.bf16.msra.mxu0 0
  %654 = vmatprep.subr.bf16.mxu0 0
  %655 = vmatpush1.bf16.msra.mxu0 0
  %656 = vmatprep.subr.bf16.mxu0 0
  %657 = vmatpush1.bf16.msra.mxu0 0
  %658 = vmatprep.subr.bf16.mxu0 0
  %659 = vmatpush1.bf16.msra.mxu0 0
  %660 = vmatprep.mubr.bf16.mxu0 0
  %661 = vmatmul.mubr.bf16.gmra.mrb[0].mxu0 %v626
  %v662 = vpop.f32.mrb[0].mxu0
  %v663 = vadd.f32 %v610, %v662
  %v664 = vpop.f32.mrb[0].mxu0
  %v665 = vpop.f32.mrb[0].mxu0
  %v666 = vpop.f32.mrb[0].mxu0
  %667 = vdwg.mxu0
  %668 = vst [vmem:[%s6] sm:$0x3] %v663
  // Predicated region
  $region26: #{forward.1} parent=0 // pred_check
    _
  $region27: #{forward.1} parent=0 // pred_check_branch
    %670 = sbr.rel (0) target = $region29
  $region28: #{forward.1} parent=0 // pred_region
    _
  $region29: #{forward.1} parent=0 // pred_fallthru
    _
  // Predicated region
  $region30: #{forward.1} parent=0 // pred_check
    _
  $region31: #{forward.1} parent=0 // pred_check_branch
    %672 = sbr.rel (0) target = $region33
  $region32: #{forward.1} parent=0 // pred_region
    _
  $region33: #{forward.1} parent=0 // pred_fallthru
    _

</llo_original>
